<compile_context>
chip_gen: v5e
topology: v5e:2x2
jax: 0.10.0
libtpu: 0.0.40
codegen_flags: <defaults>
</compile_context>

<pallas_src>
import functools

import jax
import jax.numpy as jnp
from jax import lax
from jax.experimental import pallas as pl
from jax.experimental.pallas import tpu as pltpu

LANE = 128  # lane width / alignment target for feature dims and edge-score output


def _round_up(v, m):
    return ((v + m - 1) // m) * m


# ---------------------------------------------------------------------------
# Fused Pallas kernel: 2-layer GraphSAGE + dot-product edge classifier
# ---------------------------------------------------------------------------
def _fused_gnn_classifier_kernel(
    src_ref,    # SMEM (E,)      int32   edge_index[0]
    dst_ref,    # SMEM (E,)      int32   edge_index[1]
    x_ref,      # VMEM (N, Dp)   f32     lane-padded node features (x ++ pos)
    a_ref,      # VMEM (N, N)    f32     row-normalized mean adjacency
    w1_ref,     # VMEM (2*Dp, H) f32     [W1_self ; W1_neigh]  (zero-padded)
    b1_ref,     # VMEM (1, H)    f32
    w2_ref,     # VMEM (2*H, O)  f32     [W2_self ; W2_neigh]  (zero-padded)
    b2_ref,     # VMEM (1, O)    f32
    o_ref,      # VMEM (1, E_pad) f32    lane-dense per-edge scores
    h2_ref,     # VMEM scratch (N, O) f32 - final node embeddings (gather source)
    *,
    num_edges,
):
    x = x_ref[...]                                                     # (N, Dp) f32
    a = a_ref[...]                                                     # (N, N)  f32

    # ---- GraphSAGE layer 1: h1 = relu([x | A@x] @ W1 + b1) ----
    agg1 = jnp.dot(a, x, preferred_element_type=jnp.float32)           # mean over neighbors
    z1 = jnp.concatenate([x, agg1], axis=-1)                           # (N, 2*Dp), lane-aligned
    h1 = jnp.maximum(
        jnp.dot(z1, w1_ref[...], preferred_element_type=jnp.float32) + b1_ref[...],
        0.0,
    )

    # ---- GraphSAGE layer 2: h2 = [h1 | A@h1] @ W2 + b2 ----
    agg2 = jnp.dot(a, h1, preferred_element_type=jnp.float32)
    z2 = jnp.concatenate([h1, agg2], axis=-1)                          # (N, 2*H)
    h2_ref[...] = (
        jnp.dot(z2, w2_ref[...], preferred_element_type=jnp.float32) + b2_ref[...]
    )

    # ---- Classifier: scores[e] = <h2[src[e]], h2[dst[e]]>  (SMEM-index gather) ----
    e_pad = o_ref.shape[1]
    lane_ids = lax.broadcasted_iota(jnp.int32, (1, e_pad), 1)

    def edge_score(e, acc):
        h_src = h2_ref[pl.ds(src_ref[e], 1), :]                        # (1, O) row gather
        h_dst = h2_ref[pl.ds(dst_ref[e], 1), :]
        score = jnp.sum(h_src * h_dst)                                 # scalar dot product
        return acc + jnp.where(lane_ids == e, score, 0.0)

    o_ref[...] = lax.fori_loop(
        0, num_edges, edge_score, jnp.zeros((1, e_pad), jnp.float32), unroll=True
    )


# ---------------------------------------------------------------------------
# Wrapper around the single fused pallas_call
# ---------------------------------------------------------------------------
def fused_forward(src, dst, feats, adj, w1, b1, w2, b2, *, num_edges, e_pad):
    n = feats.shape[0]
    out_pad = w2.shape[1]
    kernel = functools.partial(_fused_gnn_classifier_kernel, num_edges=num_edges)
    vmem = pl.BlockSpec(memory_space=pltpu.MemorySpace.VMEM)
    smem = pl.BlockSpec(memory_space=pltpu.MemorySpace.SMEM)
    return pl.pallas_call(
        kernel,
        out_shape=jax.ShapeDtypeStruct((1, e_pad), jnp.float32),       # lane-dense scores
        in_specs=[smem, smem] + [vmem] * 6,
        out_specs=vmem,
        scratch_shapes=[pltpu.VMEM((n, out_pad), jnp.float32)],        # h2 stays in VMEM
        compiler_params=pltpu.CompilerParams(vmem_limit_bytes=32 * 1024 * 1024),
    )(src, dst, feats, adj, w1, b1, w2, b2)


# ---------------------------------------------------------------------------
# Glue (plain JAX): adjacency, params, full forward
# ---------------------------------------------------------------------------
def build_mean_adjacency(edge_index, num_nodes):
    """Row-normalized adjacency so A @ X is the mean over in-neighbors (src -> dst).

    Built ONCE for a static graph and reused across forward calls.
    """
    src = edge_index[0]
    dst = edge_index[1]
    a = jnp.zeros((num_nodes, num_nodes), jnp.float32).at[dst, src].add(1.0)
    deg = jnp.maximum(a.sum(axis=1, keepdims=True), 1.0)
    return a / deg


def init_params(key, in_dim, hidden_dim, out_dim, *, d_pad=LANE, h_pad=LANE, o_pad=LANE):
    """GraphSAGE params. Self/neighbor weights are fused (row-concatenated) and
    zero-padded to lane-aligned widths at init time; padding is a mathematical no-op."""
    ks = jax.random.split(key, 4)
    s1 = 1.0 / jnp.sqrt(in_dim)
    s2 = 1.0 / jnp.sqrt(hidden_dim)
    w1_self = jax.random.normal(ks[0], (in_dim, hidden_dim), jnp.float32) * s1
    w1_neigh = jax.random.normal(ks[1], (in_dim, hidden_dim), jnp.float32) * s1
    w2_self = jax.random.normal(ks[2], (hidden_dim, out_dim), jnp.float32) * s2
    w2_neigh = jax.random.normal(ks[3], (hidden_dim, out_dim), jnp.float32) * s2

    def pad(w, rows, cols):
        return jnp.zeros((rows, cols), jnp.float32).at[: w.shape[0], : w.shape[1]].set(w)

    # Fused weights match the in-kernel activation concat order: z = [x | A@x].
    w1 = jnp.concatenate([pad(w1_self, d_pad, h_pad), pad(w1_neigh, d_pad, h_pad)], axis=0)
    w2 = jnp.concatenate([pad(w2_self, h_pad, o_pad), pad(w2_neigh, h_pad, o_pad)], axis=0)
    return {
        "w1": w1,                                      # (2*d_pad, h_pad)
        "b1": jnp.zeros((1, h_pad), jnp.float32),
        "w2": w2,                                      # (2*h_pad, o_pad)
        "b2": jnp.zeros((1, o_pad), jnp.float32),
    }


@jax.jit
def model_forward(params, x, pos, edge_index, adj):
    """Equivalent of Model.forward(x, pos, edge_index) -> per-edge scores, shape (E,)."""
    d_pad = params["w1"].shape[0] // 2
    feats = jnp.concatenate([x, pos], axis=-1).astype(jnp.float32)
    feats = jnp.pad(feats, ((0, 0), (0, d_pad - feats.shape[1])))       # lane-align features

    num_edges = edge_index.shape[1]
    e_pad = _round_up(max(num_edges, LANE), LANE)
    src = edge_index[0].astype(jnp.int32)
    dst = edge_index[1].astype(jnp.int32)

    scores = fused_forward(
        src, dst, feats, adj.astype(jnp.float32),
        params["w1"], params["b1"], params["w2"], params["b2"],
        num_edges=num_edges, e_pad=e_pad,
    )                                                                    # (1, e_pad)
    return scores[0, :num_edges]                                         # (E,)


if __name__ == "__main__":
    key = jax.random.PRNGKey(0)
    k_x, k_pos, k_edge, k_param = jax.random.split(key, 4)

    NUM_NODES = 16
    NUM_NODE_FEATURES = 4
    POS_DIM = 2
    HIDDEN = 32
    OUT_DIM = 32
    NUM_EDGES = 8

    x = jax.random.normal(k_x, (NUM_NODES, NUM_NODE_FEATURES), jnp.float32)
    pos = jax.random.normal(k_pos, (NUM_NODES, POS_DIM), jnp.float32)
    edge_index = jax.random.randint(k_edge, (2, NUM_EDGES), 0, NUM_NODES, jnp.int32)

    params = init_params(k_param, NUM_NODE_FEATURES + POS_DIM, HIDDEN, OUT_DIM)

    # Static graph -> build the row-normalized mean adjacency once, outside the hot path.
    adj = build_mean_adjacency(edge_index, NUM_NODES)

    out = model_forward(params, x, pos, edge_index, adj)
    jax.block_until_ready(out)
    assert out.shape == (NUM_EDGES,)
    print("KERNEL_OK")
</pallas_src>

<mosaic_0001>
module attributes {stable_mosaic.version = 11 : i64} {
  func.func @_fused_gnn_classifier_kernel(%arg0: memref<8xi32, #tpu.memory_space<smem>>, %arg1: memref<8xi32, #tpu.memory_space<smem>>, %arg2: memref<16x128xf32, #tpu.memory_space<vmem>>, %arg3: memref<16x16xf32, #tpu.memory_space<vmem>>, %arg4: memref<256x128xf32, #tpu.memory_space<vmem>>, %arg5: memref<1x128xf32, #tpu.memory_space<vmem>>, %arg6: memref<256x128xf32, #tpu.memory_space<vmem>>, %arg7: memref<1x128xf32, #tpu.memory_space<vmem>>, %arg8: memref<1x128xf32, #tpu.memory_space<vmem>>, %arg9: memref<16x128xf32, #tpu.memory_space<vmem>>) attributes {dimension_semantics = [], scalar_prefetch = 0 : i64, scratch_operands = 1 : i64, tpu.core_type = #tpu.core_type<tc>} {
    %c0 = arith.constant 0 : index
    %c0_0 = arith.constant 0 : index
    %0 = vector.load %arg2[%c0, %c0_0] : memref<16x128xf32, #tpu.memory_space<vmem>>, vector<16x128xf32>
    %c0_1 = arith.constant 0 : index
    %c0_2 = arith.constant 0 : index
    %1 = vector.load %arg3[%c0_1, %c0_2] : memref<16x16xf32, #tpu.memory_space<vmem>>, vector<16x16xf32>
    %cst = arith.constant dense<0.000000e+00> : vector<16x128xf32>
    %2 = tpu.matmul %1, %0, %cst {dimension_numbers = #tpu.dot_dimension_numbers<[1], [0], [0], [1], [0, 0, 1, 1], [], []>} : vector<16x16xf32>, vector<16x128xf32>, vector<16x128xf32> -> vector<16x128xf32>
    %3 = tpu.concatenate %0, %2 in 1 : vector<16x128xf32>, vector<16x128xf32> -> vector<16x256xf32>
    %c0_3 = arith.constant 0 : index
    %c0_4 = arith.constant 0 : index
    %4 = vector.load %arg4[%c0_3, %c0_4] : memref<256x128xf32, #tpu.memory_space<vmem>>, vector<256x128xf32>
    %cst_5 = arith.constant dense<0.000000e+00> : vector<16x128xf32>
    %5 = tpu.matmul %3, %4, %cst_5 {dimension_numbers = #tpu.dot_dimension_numbers<[1], [0], [0], [1], [0, 0, 1, 1], [], []>} : vector<16x256xf32>, vector<256x128xf32>, vector<16x128xf32> -> vector<16x128xf32>
    %c0_6 = arith.constant 0 : index
    %c0_7 = arith.constant 0 : index
    %6 = vector.load %arg5[%c0_6, %c0_7] : memref<1x128xf32, #tpu.memory_space<vmem>>, vector<1x128xf32>
    %7 = vector.broadcast %6 : vector<1x128xf32> to vector<16x128xf32>
    %8 = arith.addf %5, %7 : vector<16x128xf32>
    %cst_8 = arith.constant 0.000000e+00 : f32
    %9 = vector.broadcast %cst_8 : f32 to vector<16x128xf32>
    %10 = arith.maximumf %8, %9 : vector<16x128xf32>
    %cst_9 = arith.constant dense<0.000000e+00> : vector<16x128xf32>
    %11 = tpu.matmul %1, %10, %cst_9 {dimension_numbers = #tpu.dot_dimension_numbers<[1], [0], [0], [1], [0, 0, 1, 1], [], []>} : vector<16x16xf32>, vector<16x128xf32>, vector<16x128xf32> -> vector<16x128xf32>
    %12 = tpu.concatenate %10, %11 in 1 : vector<16x128xf32>, vector<16x128xf32> -> vector<16x256xf32>
    %c0_10 = arith.constant 0 : index
    %c0_11 = arith.constant 0 : index
    %13 = vector.load %arg6[%c0_10, %c0_11] : memref<256x128xf32, #tpu.memory_space<vmem>>, vector<256x128xf32>
    %cst_12 = arith.constant dense<0.000000e+00> : vector<16x128xf32>
    %14 = tpu.matmul %12, %13, %cst_12 {dimension_numbers = #tpu.dot_dimension_numbers<[1], [0], [0], [1], [0, 0, 1, 1], [], []>} : vector<16x256xf32>, vector<256x128xf32>, vector<16x128xf32> -> vector<16x128xf32>
    %c0_13 = arith.constant 0 : index
    %c0_14 = arith.constant 0 : index
    %15 = vector.load %arg7[%c0_13, %c0_14] : memref<1x128xf32, #tpu.memory_space<vmem>>, vector<1x128xf32>
    %16 = vector.broadcast %15 : vector<1x128xf32> to vector<16x128xf32>
    %17 = arith.addf %14, %16 : vector<16x128xf32>
    %c0_15 = arith.constant 0 : index
    %c0_16 = arith.constant 0 : index
    %18 = vector.load %arg9[%c0_15, %c0_16] : memref<16x128xf32, #tpu.memory_space<vmem>>, vector<16x128xf32>
    tpu.vector_store %arg9[%c0_15, %c0_16], %17 {strides = array<i32>} : memref<16x128xf32, #tpu.memory_space<vmem>>, vector<16x128xf32>,
    %19 = tpu.iota {dimensions = array<i32: 1>} : vector<1x128xi32>
    %cst_17 = arith.constant 0.000000e+00 : f32
    %20 = vector.broadcast %cst_17 : f32 to vector<1x128xf32>
    %c0_i32 = arith.constant 0 : i32
    %21 = arith.index_cast %c0_i32 : i32 to index
    %22 = memref.load %arg0[%21] : memref<8xi32, #tpu.memory_space<smem>>
    %23 = arith.index_cast %22 : i32 to index
    %c0_18 = arith.constant 0 : index
    %24 = vector.load %arg9[%23, %c0_18] : memref<16x128xf32, #tpu.memory_space<vmem>>, vector<1x128xf32>
    %25 = arith.index_cast %c0_i32 : i32 to index
    %26 = memref.load %arg1[%25] : memref<8xi32, #tpu.memory_space<smem>>
    %27 = arith.index_cast %26 : i32 to index
    %c0_19 = arith.constant 0 : index
    %28 = vector.load %arg9[%27, %c0_19] : memref<16x128xf32, #tpu.memory_space<vmem>>, vector<1x128xf32>
    %29 = arith.mulf %24, %28 : vector<1x128xf32>
    %30 = vector.shape_cast %29 : vector<1x128xf32> to vector<1x1x128xf32>
    %cst_20 = arith.constant dense<0.000000e+00> : vector<1xf32>
    %31 = vector.multi_reduction <add>, %30, %cst_20 [1, 2] : vector<1x1x128xf32> to vector<1xf32>
    %32 = vector.shape_cast %31 : vector<1xf32> to vector<1x1x1xf32>
    %33 = vector.extract %32[0, 0, 0] : f32 from vector<1x1x1xf32>
    %34 = vector.broadcast %c0_i32 : i32 to vector<1x128xi32>
    %35 = arith.cmpi eq, %19, %34 : vector<1x128xi32>
    %cst_21 = arith.constant 0.000000e+00 : f32
    %36 = vector.broadcast %33 : f32 to vector<1x128xf32>
    %37 = vector.broadcast %cst_21 : f32 to vector<1x128xf32>
    %38 = arith.select %35, %36, %37 : vector<1x128xi1>, vector<1x128xf32>
    %39 = arith.addf %20, %38 : vector<1x128xf32>
    %c1_i32 = arith.constant 1 : i32
    %40 = arith.index_cast %c1_i32 : i32 to index
    %41 = memref.load %arg0[%40] : memref<8xi32, #tpu.memory_space<smem>>
    %42 = arith.index_cast %41 : i32 to index
    %c0_22 = arith.constant 0 : index
    %43 = vector.load %arg9[%42, %c0_22] : memref<16x128xf32, #tpu.memory_space<vmem>>, vector<1x128xf32>
    %44 = arith.index_cast %c1_i32 : i32 to index
    %45 = memref.load %arg1[%44] : memref<8xi32, #tpu.memory_space<smem>>
    %46 = arith.index_cast %45 : i32 to index
    %c0_23 = arith.constant 0 : index
    %47 = vector.load %arg9[%46, %c0_23] : memref<16x128xf32, #tpu.memory_space<vmem>>, vector<1x128xf32>
    %48 = arith.mulf %43, %47 : vector<1x128xf32>
    %49 = vector.shape_cast %48 : vector<1x128xf32> to vector<1x1x128xf32>
    %cst_24 = arith.constant dense<0.000000e+00> : vector<1xf32>
    %50 = vector.multi_reduction <add>, %49, %cst_24 [1, 2] : vector<1x1x128xf32> to vector<1xf32>
    %51 = vector.shape_cast %50 : vector<1xf32> to vector<1x1x1xf32>
    %52 = vector.extract %51[0, 0, 0] : f32 from vector<1x1x1xf32>
    %53 = vector.broadcast %c1_i32 : i32 to vector<1x128xi32>
    %54 = arith.cmpi eq, %19, %53 : vector<1x128xi32>
    %cst_25 = arith.constant 0.000000e+00 : f32
    %55 = vector.broadcast %52 : f32 to vector<1x128xf32>
    %56 = vector.broadcast %cst_25 : f32 to vector<1x128xf32>
    %57 = arith.select %54, %55, %56 : vector<1x128xi1>, vector<1x128xf32>
    %58 = arith.addf %39, %57 : vector<1x128xf32>
    %c2_i32 = arith.constant 2 : i32
    %59 = arith.index_cast %c2_i32 : i32 to index
    %60 = memref.load %arg0[%59] : memref<8xi32, #tpu.memory_space<smem>>
    %61 = arith.index_cast %60 : i32 to index
    %c0_26 = arith.constant 0 : index
    %62 = vector.load %arg9[%61, %c0_26] : memref<16x128xf32, #tpu.memory_space<vmem>>, vector<1x128xf32>
    %63 = arith.index_cast %c2_i32 : i32 to index
    %64 = memref.load %arg1[%63] : memref<8xi32, #tpu.memory_space<smem>>
    %65 = arith.index_cast %64 : i32 to index
    %c0_27 = arith.constant 0 : index
    %66 = vector.load %arg9[%65, %c0_27] : memref<16x128xf32, #tpu.memory_space<vmem>>, vector<1x128xf32>
    %67 = arith.mulf %62, %66 : vector<1x128xf32>
    %68 = vector.shape_cast %67 : vector<1x128xf32> to vector<1x1x128xf32>
    %cst_28 = arith.constant dense<0.000000e+00> : vector<1xf32>
    %69 = vector.multi_reduction <add>, %68, %cst_28 [1, 2] : vector<1x1x128xf32> to vector<1xf32>
    %70 = vector.shape_cast %69 : vector<1xf32> to vector<1x1x1xf32>
    %71 = vector.extract %70[0, 0, 0] : f32 from vector<1x1x1xf32>
    %72 = vector.broadcast %c2_i32 : i32 to vector<1x128xi32>
    %73 = arith.cmpi eq, %19, %72 : vector<1x128xi32>
    %cst_29 = arith.constant 0.000000e+00 : f32
    %74 = vector.broadcast %71 : f32 to vector<1x128xf32>
    %75 = vector.broadcast %cst_29 : f32 to vector<1x128xf32>
    %76 = arith.select %73, %74, %75 : vector<1x128xi1>, vector<1x128xf32>
    %77 = arith.addf %58, %76 : vector<1x128xf32>
    %c3_i32 = arith.constant 3 : i32
    %78 = arith.index_cast %c3_i32 : i32 to index
    %79 = memref.load %arg0[%78] : memref<8xi32, #tpu.memory_space<smem>>
    %80 = arith.index_cast %79 : i32 to index
    %c0_30 = arith.constant 0 : index
    %81 = vector.load %arg9[%80, %c0_30] : memref<16x128xf32, #tpu.memory_space<vmem>>, vector<1x128xf32>
    %82 = arith.index_cast %c3_i32 : i32 to index
    %83 = memref.load %arg1[%82] : memref<8xi32, #tpu.memory_space<smem>>
    %84 = arith.index_cast %83 : i32 to index
    %c0_31 = arith.constant 0 : index
    %85 = vector.load %arg9[%84, %c0_31] : memref<16x128xf32, #tpu.memory_space<vmem>>, vector<1x128xf32>
    %86 = arith.mulf %81, %85 : vector<1x128xf32>
    %87 = vector.shape_cast %86 : vector<1x128xf32> to vector<1x1x128xf32>
    %cst_32 = arith.constant dense<0.000000e+00> : vector<1xf32>
    %88 = vector.multi_reduction <add>, %87, %cst_32 [1, 2] : vector<1x1x128xf32> to vector<1xf32>
    %89 = vector.shape_cast %88 : vector<1xf32> to vector<1x1x1xf32>
    %90 = vector.extract %89[0, 0, 0] : f32 from vector<1x1x1xf32>
    %91 = vector.broadcast %c3_i32 : i32 to vector<1x128xi32>
    %92 = arith.cmpi eq, %19, %91 : vector<1x128xi32>
    %cst_33 = arith.constant 0.000000e+00 : f32
    %93 = vector.broadcast %90 : f32 to vector<1x128xf32>
    %94 = vector.broadcast %cst_33 : f32 to vector<1x128xf32>
    %95 = arith.select %92, %93, %94 : vector<1x128xi1>, vector<1x128xf32>
    %96 = arith.addf %77, %95 : vector<1x128xf32>
    %c4_i32 = arith.constant 4 : i32
    %97 = arith.index_cast %c4_i32 : i32 to index
    %98 = memref.load %arg0[%97] : memref<8xi32, #tpu.memory_space<smem>>
    %99 = arith.index_cast %98 : i32 to index
    %c0_34 = arith.constant 0 : index
    %100 = vector.load %arg9[%99, %c0_34] : memref<16x128xf32, #tpu.memory_space<vmem>>, vector<1x128xf32>
    %101 = arith.index_cast %c4_i32 : i32 to index
    %102 = memref.load %arg1[%101] : memref<8xi32, #tpu.memory_space<smem>>
    %103 = arith.index_cast %102 : i32 to index
    %c0_35 = arith.constant 0 : index
    %104 = vector.load %arg9[%103, %c0_35] : memref<16x128xf32, #tpu.memory_space<vmem>>, vector<1x128xf32>
    %105 = arith.mulf %100, %104 : vector<1x128xf32>
    %106 = vector.shape_cast %105 : vector<1x128xf32> to vector<1x1x128xf32>
    %cst_36 = arith.constant dense<0.000000e+00> : vector<1xf32>
    %107 = vector.multi_reduction <add>, %106, %cst_36 [1, 2] : vector<1x1x128xf32> to vector<1xf32>
    %108 = vector.shape_cast %107 : vector<1xf32> to vector<1x1x1xf32>
    %109 = vector.extract %108[0, 0, 0] : f32 from vector<1x1x1xf32>
    %110 = vector.broadcast %c4_i32 : i32 to vector<1x128xi32>
    %111 = arith.cmpi eq, %19, %110 : vector<1x128xi32>
    %cst_37 = arith.constant 0.000000e+00 : f32
    %112 = vector.broadcast %109 : f32 to vector<1x128xf32>
    %113 = vector.broadcast %cst_37 : f32 to vector<1x128xf32>
    %114 = arith.select %111, %112, %113 : vector<1x128xi1>, vector<1x128xf32>
    %115 = arith.addf %96, %114 : vector<1x128xf32>
    %c5_i32 = arith.constant 5 : i32
    %116 = arith.index_cast %c5_i32 : i32 to index
    %117 = memref.load %arg0[%116] : memref<8xi32, #tpu.memory_space<smem>>
    %118 = arith.index_cast %117 : i32 to index
    %c0_38 = arith.constant 0 : index
    %119 = vector.load %arg9[%118, %c0_38] : memref<16x128xf32, #tpu.memory_space<vmem>>, vector<1x128xf32>
    %120 = arith.index_cast %c5_i32 : i32 to index
    %121 = memref.load %arg1[%120] : memref<8xi32, #tpu.memory_space<smem>>
    %122 = arith.index_cast %121 : i32 to index
    %c0_39 = arith.constant 0 : index
    %123 = vector.load %arg9[%122, %c0_39] : memref<16x128xf32, #tpu.memory_space<vmem>>, vector<1x128xf32>
    %124 = arith.mulf %119, %123 : vector<1x128xf32>
    %125 = vector.shape_cast %124 : vector<1x128xf32> to vector<1x1x128xf32>
    %cst_40 = arith.constant dense<0.000000e+00> : vector<1xf32>
    %126 = vector.multi_reduction <add>, %125, %cst_40 [1, 2] : vector<1x1x128xf32> to vector<1xf32>
    %127 = vector.shape_cast %126 : vector<1xf32> to vector<1x1x1xf32>
    %128 = vector.extract %127[0, 0, 0] : f32 from vector<1x1x1xf32>
    %129 = vector.broadcast %c5_i32 : i32 to vector<1x128xi32>
    %130 = arith.cmpi eq, %19, %129 : vector<1x128xi32>
    %cst_41 = arith.constant 0.000000e+00 : f32
    %131 = vector.broadcast %128 : f32 to vector<1x128xf32>
    %132 = vector.broadcast %cst_41 : f32 to vector<1x128xf32>
    %133 = arith.select %130, %131, %132 : vector<1x128xi1>, vector<1x128xf32>
    %134 = arith.addf %115, %133 : vector<1x128xf32>
    %c6_i32 = arith.constant 6 : i32
    %135 = arith.index_cast %c6_i32 : i32 to index
    %136 = memref.load %arg0[%135] : memref<8xi32, #tpu.memory_space<smem>>
    %137 = arith.index_cast %136 : i32 to index
    %c0_42 = arith.constant 0 : index
    %138 = vector.load %arg9[%137, %c0_42] : memref<16x128xf32, #tpu.memory_space<vmem>>, vector<1x128xf32>
    %139 = arith.index_cast %c6_i32 : i32 to index
    %140 = memref.load %arg1[%139] : memref<8xi32, #tpu.memory_space<smem>>
    %141 = arith.index_cast %140 : i32 to index
    %c0_43 = arith.constant 0 : index
    %142 = vector.load %arg9[%141, %c0_43] : memref<16x128xf32, #tpu.memory_space<vmem>>, vector<1x128xf32>
    %143 = arith.mulf %138, %142 : vector<1x128xf32>
    %144 = vector.shape_cast %143 : vector<1x128xf32> to vector<1x1x128xf32>
    %cst_44 = arith.constant dense<0.000000e+00> : vector<1xf32>
    %145 = vector.multi_reduction <add>, %144, %cst_44 [1, 2] : vector<1x1x128xf32> to vector<1xf32>
    %146 = vector.shape_cast %145 : vector<1xf32> to vector<1x1x1xf32>
    %147 = vector.extract %146[0, 0, 0] : f32 from vector<1x1x1xf32>
    %148 = vector.broadcast %c6_i32 : i32 to vector<1x128xi32>
    %149 = arith.cmpi eq, %19, %148 : vector<1x128xi32>
    %cst_45 = arith.constant 0.000000e+00 : f32
    %150 = vector.broadcast %147 : f32 to vector<1x128xf32>
    %151 = vector.broadcast %cst_45 : f32 to vector<1x128xf32>
    %152 = arith.select %149, %150, %151 : vector<1x128xi1>, vector<1x128xf32>
    %153 = arith.addf %134, %152 : vector<1x128xf32>
    %c7_i32 = arith.constant 7 : i32
    %154 = arith.index_cast %c7_i32 : i32 to index
    %155 = memref.load %arg0[%154] : memref<8xi32, #tpu.memory_space<smem>>
    %156 = arith.index_cast %155 : i32 to index
    %c0_46 = arith.constant 0 : index
    %157 = vector.load %arg9[%156, %c0_46] : memref<16x128xf32, #tpu.memory_space<vmem>>, vector<1x128xf32>
    %158 = arith.index_cast %c7_i32 : i32 to index
    %159 = memref.load %arg1[%158] : memref<8xi32, #tpu.memory_space<smem>>
    %160 = arith.index_cast %159 : i32 to index
    %c0_47 = arith.constant 0 : index
    %161 = vector.load %arg9[%160, %c0_47] : memref<16x128xf32, #tpu.memory_space<vmem>>, vector<1x128xf32>
    %162 = arith.mulf %157, %161 : vector<1x128xf32>
    %163 = vector.shape_cast %162 : vector<1x128xf32> to vector<1x1x128xf32>
    %cst_48 = arith.constant dense<0.000000e+00> : vector<1xf32>
    %164 = vector.multi_reduction <add>, %163, %cst_48 [1, 2] : vector<1x1x128xf32> to vector<1xf32>
    %165 = vector.shape_cast %164 : vector<1xf32> to vector<1x1x1xf32>
    %166 = vector.extract %165[0, 0, 0] : f32 from vector<1x1x1xf32>
    %167 = vector.broadcast %c7_i32 : i32 to vector<1x128xi32>
    %168 = arith.cmpi eq, %19, %167 : vector<1x128xi32>
    %cst_49 = arith.constant 0.000000e+00 : f32
    %169 = vector.broadcast %166 : f32 to vector<1x128xf32>
    %170 = vector.broadcast %cst_49 : f32 to vector<1x128xf32>
    %171 = arith.select %168, %169, %170 : vector<1x128xi1>, vector<1x128xf32>
    %172 = arith.addf %153, %171 : vector<1x128xf32>
    %c8_i32 = arith.constant 8 : i32
    %c0_50 = arith.constant 0 : index
    %c0_51 = arith.constant 0 : index
    %173 = vector.load %arg8[%c0_50, %c0_51] : memref<1x128xf32, #tpu.memory_space<vmem>>, vector<1x128xf32>
    tpu.vector_store %arg8[%c0_50, %c0_51], %172 {strides = array<i32>} : memref<1x128xf32, #tpu.memory_space<vmem>>, vector<1x128xf32>,
    return
  }
}

</mosaic_0001>

<llo_original>
// kernel: model_forward.1
$region0: #{model_forward.1}
  #allocation0 [shape = 'u32[]', space=smem, size = 0x4, offset = 0x4, fixed_abs, tag = 'smem constant byte address 0x4 - core index']
  #allocation1 [shape = 'u32[72,128]{1,0:T(1,128)}', space=vmem, size = 0x9000, scoped, tag = 'internal scratch']
  #allocation2 [shape = 'f32[16,128]{1,0:T(8,128)}', space=vmem, size = 0x2000, scoped, tag = 'scratch operand']
  %s0 = inlined_call_operand.vmem [shape: s32[8], index: 0, kind: input, shape index: {}]
  %s1 = inlined_call_operand.vmem [shape: s32[8], index: 1, kind: input, shape index: {}]
  %s2 = inlined_call_operand.vmem [shape: f32[16,128], index: 2, kind: input, shape index: {}]
  %s3 = inlined_call_operand.vmem [shape: f32[16,16], index: 3, kind: input, shape index: {}]
  %s4 = inlined_call_operand.hbm [shape: f32[256,128], index: 4, kind: input, shape index: {}]
  %s5 = inlined_call_operand.vmem [shape: f32[1,128], index: 5, kind: input, shape index: {}]
  %s6 = inlined_call_operand.hbm [shape: f32[256,128], index: 6, kind: input, shape index: {}]
  %s7 = inlined_call_operand.vmem [shape: f32[1,128], index: 7, kind: input, shape index: {}]
  %s8 = inlined_call_operand.vmem [shape: f32[1,128], index: 8, kind: output, shape index: {}]
  %s9 = sld [smem:[#allocation0]]
  $region58: #{model_forward.1} parent=0
    _
  %s11 = ssub.s32 1, %s9
  %s12 = scalar_select 0, %s11, %s9
  $region1: #{model_forward.1} parent=0
    #allocation3 [shape = 'u8[512]{0}', space=smem, size = 0x200, scoped, tag = 'input window, operand 0, single buffered']
    #allocation4 [shape = 's32[1]{0}', space=sflag, size = 0x4, scoped, tag = 'scoped memory for model_forward.1']
    #allocation5 [shape = 's32[1]{0}', space=sflag, size = 0x4, scoped, tag = 'scoped memory for model_forward.1']
    #allocation6 [shape = 'u8[512]{0}', space=smem, size = 0x200, scoped, tag = 'input window, operand 1, single buffered']
    #allocation7 [shape = 's32[1]{0}', space=sflag, size = 0x4, scoped, tag = 'scoped memory for model_forward.1']
    #allocation8 [shape = 'u8[131072]{0}', space=vmem, size = 0x20000, scoped, tag = 'input window, operand 4, single buffered']
    #allocation9 [shape = 'u8[131072]{0}', space=vmem, size = 0x20000, scoped, tag = 'input window, operand 6, single buffered']
    #allocation10 [shape = 's32[1]{0}', space=sflag, size = 0x4, scoped, tag = 'scoped memory for model_forward.1']
    %13 = vsyncpa [#allocation5], 0
    %14 = vsyncpa [#allocation7], 0
    %15 = vsyncpa [#allocation4], 0
    %16 = vsyncpa [#allocation10], 0
    // Predicated region
    $region2: #{model_forward.1} parent=1 // pred_check
      _
    $region3: #{model_forward.1} parent=1 // pred_check_branch
      %18 = sbr.rel (0) target = $region5
    $region4: #{model_forward.1} parent=1 // pred_region
      %20 = vsyncadd [#allocation5], 0
      %s22 = sshll.u32 %s0, 4
      %s23 = int_to_ptr.vmem [resolvable:$true] %s22
      %25 = dma.vmem_to_smem %s23, 16, [#allocation3], [#allocation5]
    $region5: #{model_forward.1} parent=1 // pred_fallthru
      _
    // Predicated region
    $region6: #{model_forward.1} parent=1 // pred_check
      _
    $region7: #{model_forward.1} parent=1 // pred_check_branch
      %27 = sbr.rel (0) target = $region9
    $region8: #{model_forward.1} parent=1 // pred_region
      %29 = vsyncadd [#allocation7], 0
      %s31 = sshll.u32 %s1, 4
      %s32 = int_to_ptr.vmem [resolvable:$true] %s31
      %34 = dma.vmem_to_smem %s32, 16, [#allocation6], [#allocation7]
    $region9: #{model_forward.1} parent=1 // pred_fallthru
      _
    // Predicated region
    $region10: #{model_forward.1} parent=1 // pred_check
      _
    $region11: #{model_forward.1} parent=1 // pred_check_branch
      %36 = sbr.rel (0) target = $region13
    $region12: #{model_forward.1} parent=1 // pred_region
      _
    $region13: #{model_forward.1} parent=1 // pred_fallthru
      _
    // Predicated region
    $region14: #{model_forward.1} parent=1 // pred_check
      _
    $region15: #{model_forward.1} parent=1 // pred_check_branch
      %38 = sbr.rel (0) target = $region17
    $region16: #{model_forward.1} parent=1 // pred_region
      _
    $region17: #{model_forward.1} parent=1 // pred_fallthru
      _
    // Predicated region
    $region18: #{model_forward.1} parent=1 // pred_check
      _
    $region19: #{model_forward.1} parent=1 // pred_check_branch
      %40 = sbr.rel (0) target = $region21
    $region20: #{model_forward.1} parent=1 // pred_region
      %42 = vsyncadd [#allocation4], 0
      %s43 = sshll.u32 %s4, 4
      %s44 = int_to_ptr.hbm [resolvable:$true] %s43
      %s45 = sshll.u32 [#allocation8], 4
      %s46 = int_to_ptr.vmem [resolvable:$true] %s45
      %51 = dma.hbm_to_vmem [thread:$0]  %s44, 4096, %s46, [#allocation4], 128, 128, 8
    $region21: #{model_forward.1} parent=1 // pred_fallthru
      _
    // Predicated region
    $region22: #{model_forward.1} parent=1 // pred_check
      _
    $region23: #{model_forward.1} parent=1 // pred_check_branch
      %53 = sbr.rel (0) target = $region25
    $region24: #{model_forward.1} parent=1 // pred_region
      _
    $region25: #{model_forward.1} parent=1 // pred_fallthru
      _
    // Predicated region
    $region26: #{model_forward.1} parent=1 // pred_check
      _
    $region27: #{model_forward.1} parent=1 // pred_check_branch
      %55 = sbr.rel (0) target = $region29
    $region28: #{model_forward.1} parent=1 // pred_region
      %57 = vsyncadd [#allocation10], 0
      %s58 = sshll.u32 %s6, 4
      %s59 = int_to_ptr.hbm [resolvable:$true] %s58
      %s60 = sshll.u32 [#allocation9], 4
      %s61 = int_to_ptr.vmem [resolvable:$true] %s60
      %66 = dma.hbm_to_vmem [thread:$0]  %s59, 4096, %s61, [#allocation10], 128, 128, 8
    $region29: #{model_forward.1} parent=1 // pred_fallthru
      _
    // Predicated region
    $region30: #{model_forward.1} parent=1 // pred_check
      _
    $region31: #{model_forward.1} parent=1 // pred_check_branch
      %68 = sbr.rel (0) target = $region33
    $region32: #{model_forward.1} parent=1 // pred_region
      _
    $region33: #{model_forward.1} parent=1 // pred_fallthru
      _
    // Predicated region
    $region34: #{model_forward.1} parent=1 // pred_check
      _
    $region35: #{model_forward.1} parent=1 // pred_check_branch
      %70 = sbr.rel (0) target = $region37
    $region36: #{model_forward.1} parent=1 // pred_region
      %72 = dma.done [#allocation5], 16
    $region37: #{model_forward.1} parent=1 // pred_fallthru
      _
    // Predicated region
    $region38: #{model_forward.1} parent=1 // pred_check
      _
    $region39: #{model_forward.1} parent=1 // pred_check_branch
      %74 = sbr.rel (0) target = $region41
    $region40: #{model_forward.1} parent=1 // pred_region
      %76 = dma.done [#allocation7], 16
    $region41: #{model_forward.1} parent=1 // pred_fallthru
      _
    // Predicated region
    $region42: #{model_forward.1} parent=1 // pred_check
      _
    $region43: #{model_forward.1} parent=1 // pred_check_branch
      %78 = sbr.rel (0) target = $region45
    $region44: #{model_forward.1} parent=1 // pred_region
      %80 = dma.done [#allocation4], 4096
    $region45: #{model_forward.1} parent=1 // pred_fallthru
      _
    // Predicated region
    $region46: #{model_forward.1} parent=1 // pred_check
      _
    $region47: #{model_forward.1} parent=1 // pred_check_branch
      %82 = sbr.rel (0) target = $region49
    $region48: #{model_forward.1} parent=1 // pred_region
      %84 = dma.done [#allocation10], 4096
    $region49: #{model_forward.1} parent=1 // pred_fallthru
      _
    %85 = sfence
    %v86 = vld [vmem:[%s2] sm:$0xff]
    %v87 = vld [vmem:[%s2 + $0x8] sm:$0xff]
    %v88 = vld [vmem:[%s3] sm:$0xff]
    %v89 = vld [vmem:[%s3 + $0x8] sm:$0xff]
    %vm90 = vcmask 130048
    %v92 = vsel %vm90, %v88, 0
    %v95 = vsel %vm90, %v89, 0
    %97 = vmatpush.msra.mxu0 0.0
    %98 = vmatpush.msra.mxu0 0.0
    %99 = vmatpush.msra.mxu0 0.0
    %100 = vmatpush.msra.mxu0 0.0
    %101 = vmatpush.msra.mxu0 0.0
    %102 = vmatpush.msra.mxu0 0.0
    %103 = vmatpush.msra.mxu0 0.0
    %104 = vmatpush.msra.mxu0 0.0
    %105 = vmatpush.msra.mxu0 0.0
    %106 = vmatpush.msra.mxu0 0.0
    %107 = vmatpush.msra.mxu0 0.0
    %108 = vmatpush.msra.mxu0 0.0
    %109 = vmatpush.msra.mxu0 0.0
    %110 = vmatpush.msra.mxu0 0.0
    %111 = vmatpush.msra.mxu0 %v87
    %112 = vmatpush.msra.mxu0 %v86
    %113 = vmatmul.f32.gmra.mxu0 %v92
    %v114 = vpop.f32.mrf.mxu0
    %v115 = vadd.f32 0.0, %v114
    %116 = vmatmul.f32.gmra.mxu0 %v95
    %v117 = vpop.f32.mrf.mxu0
    %v118 = vadd.f32 0.0, %v117
    %119 = vdwg.mxu0
    %v120 = vld [vmem:[#allocation8] sm:$0xff]
    %v121 = vld [vmem:[#allocation8 + $0x8] sm:$0xff]
    %v122 = vld [vmem:[#allocation8 + $0x10] sm:$0xff]
    %v123 = vld [vmem:[#allocation8 + $0x18] sm:$0xff]
    %v124 = vld [vmem:[#allocation8 + $0x20] sm:$0xff]
    %v125 = vld [vmem:[#allocation8 + $0x28] sm:$0xff]
    %v126 = vld [vmem:[#allocation8 + $0x30] sm:$0xff]
    %v127 = vld [vmem:[#allocation8 + $0x38] sm:$0xff]
    %v128 = vld [vmem:[#allocation8 + $0x40] sm:$0xff]
    %v129 = vld [vmem:[#allocation8 + $0x48] sm:$0xff]
    %v130 = vld [vmem:[#allocation8 + $0x50] sm:$0xff]
    %v131 = vld [vmem:[#allocation8 + $0x58] sm:$0xff]
    %v132 = vld [vmem:[#allocation8 + $0x60] sm:$0xff]
    %v133 = vld [vmem:[#allocation8 + $0x68] sm:$0xff]
    %v134 = vld [vmem:[#allocation8 + $0x70] sm:$0xff]
    %v135 = vld [vmem:[#allocation8 + $0x78] sm:$0xff]
    %v136 = vld [vmem:[#allocation8 + $0x80] sm:$0xff]
    %v137 = vld [vmem:[#allocation8 + $0x88] sm:$0xff]
    %v138 = vld [vmem:[#allocation8 + $0x90] sm:$0xff]
    %v139 = vld [vmem:[#allocation8 + $0x98] sm:$0xff]
    %v140 = vld [vmem:[#allocation8 + $0xa0] sm:$0xff]
    %v141 = vld [vmem:[#allocation8 + $0xa8] sm:$0xff]
    %v142 = vld [vmem:[#allocation8 + $0xb0] sm:$0xff]
    %v143 = vld [vmem:[#allocation8 + $0xb8] sm:$0xff]
    %v144 = vld [vmem:[#allocation8 + $0xc0] sm:$0xff]
    %v145 = vld [vmem:[#allocation8 + $0xc8] sm:$0xff]
    %v146 = vld [vmem:[#allocation8 + $0xd0] sm:$0xff]
    %v147 = vld [vmem:[#allocation8 + $0xd8] sm:$0xff]
    %v148 = vld [vmem:[#allocation8 + $0xe0] sm:$0xff]
    %v149 = vld [vmem:[#allocation8 + $0xe8] sm:$0xff]
    %v150 = vld [vmem:[#allocation8 + $0xf0] sm:$0xff]
    %v151 = vld [vmem:[#allocation8 + $0xf8] sm:$0xff]
    %v152 = vld [vmem:[%s5] sm:$0x1]
    %v154 = vperm.slane %v152, 0
    %156 = vmatpush.msra.mxu0 %v135
    %157 = vmatpush.msra.mxu0 %v134
    %158 = vmatpush.msra.mxu0 %v133
    %159 = vmatpush.msra.mxu0 %v132
    %160 = vmatpush.msra.mxu0 %v131
    %161 = vmatpush.msra.mxu0 %v130
    %162 = vmatpush.msra.mxu0 %v129
    %163 = vmatpush.msra.mxu0 %v128
    %164 = vmatpush.msra.mxu0 %v127
    %165 = vmatpush.msra.mxu0 %v126
    %166 = vmatpush.msra.mxu0 %v125
    %167 = vmatpush.msra.mxu0 %v124
    %168 = vmatpush.msra.mxu0 %v123
    %169 = vmatpush.msra.mxu0 %v122
    %170 = vmatpush.msra.mxu0 %v121
    %171 = vmatpush.msra.mxu0 %v120
    %172 = vmatmul.f32.gmra.mxu0 %v86
    %v173 = vpop.f32.mrf.mxu0
    %v174 = vadd.f32 %v154, %v173
    %175 = vmatmul.f32.gmra.mxu0 %v87
    %v176 = vpop.f32.mrf.mxu0
    %v177 = vadd.f32 %v154, %v176
    %178 = vdwg.mxu0
    %179 = vmatpush.msra.mxu0 %v151
    %180 = vmatpush.msra.mxu0 %v150
    %181 = vmatpush.msra.mxu0 %v149
    %182 = vmatpush.msra.mxu0 %v148
    %183 = vmatpush.msra.mxu0 %v147
    %184 = vmatpush.msra.mxu0 %v146
    %185 = vmatpush.msra.mxu0 %v145
    %186 = vmatpush.msra.mxu0 %v144
    %187 = vmatpush.msra.mxu0 %v143
    %188 = vmatpush.msra.mxu0 %v142
    %189 = vmatpush.msra.mxu0 %v141
    %190 = vmatpush.msra.mxu0 %v140
    %191 = vmatpush.msra.mxu0 %v139
    %192 = vmatpush.msra.mxu0 %v138
    %193 = vmatpush.msra.mxu0 %v137
    %194 = vmatpush.msra.mxu0 %v136
    %195 = vmatmul.f32.gmra.mxu0 %v115
    %v196 = vpop.f32.mrf.mxu0
    %v197 = vadd.f32 %v174, %v196
    %198 = vmatmul.f32.gmra.mxu0 %v118
    %v199 = vpop.f32.mrf.mxu0
    %v200 = vadd.f32 %v177, %v199
    %201 = vdwg.mxu0
    %v202 = vmax.f32 %v197, 0.0
    %v203 = vmax.f32 %v200, 0.0
    %204 = vmatpush.msra.mxu0 0.0
    %205 = vmatpush.msra.mxu0 0.0
    %206 = vmatpush.msra.mxu0 0.0
    %207 = vmatpush.msra.mxu0 0.0
    %208 = vmatpush.msra.mxu0 0.0
    %209 = vmatpush.msra.mxu0 0.0
    %210 = vmatpush.msra.mxu0 0.0
    %211 = vmatpush.msra.mxu0 0.0
    %212 = vmatpush.msra.mxu0 0.0
    %213 = vmatpush.msra.mxu0 0.0
    %214 = vmatpush.msra.mxu0 0.0
    %215 = vmatpush.msra.mxu0 0.0
    %216 = vmatpush.msra.mxu0 0.0
    %217 = vmatpush.msra.mxu0 0.0
    %218 = vmatpush.msra.mxu0 %v203
    %219 = vmatpush.msra.mxu0 %v202
    %220 = vmatmul.f32.gmra.mxu0 %v92
    %v221 = vpop.f32.mrf.mxu0
    %v222 = vadd.f32 0.0, %v221
    %223 = vmatmul.f32.gmra.mxu0 %v95
    %v224 = vpop.f32.mrf.mxu0
    %v225 = vadd.f32 0.0, %v224
    %226 = vdwg.mxu0
    %v227 = vld [vmem:[#allocation9] sm:$0xff]
    %v228 = vld [vmem:[#allocation9 + $0x8] sm:$0xff]
    %v229 = vld [vmem:[#allocation9 + $0x10] sm:$0xff]
    %v230 = vld [vmem:[#allocation9 + $0x18] sm:$0xff]
    %v231 = vld [vmem:[#allocation9 + $0x20] sm:$0xff]
    %v232 = vld [vmem:[#allocation9 + $0x28] sm:$0xff]
    %v233 = vld [vmem:[#allocation9 + $0x30] sm:$0xff]
    %v234 = vld [vmem:[#allocation9 + $0x38] sm:$0xff]
    %v235 = vld [vmem:[#allocation9 + $0x40] sm:$0xff]
    %v236 = vld [vmem:[#allocation9 + $0x48] sm:$0xff]
    %v237 = vld [vmem:[#allocation9 + $0x50] sm:$0xff]
    %v238 = vld [vmem:[#allocation9 + $0x58] sm:$0xff]
    %v239 = vld [vmem:[#allocation9 + $0x60] sm:$0xff]
    %v240 = vld [vmem:[#allocation9 + $0x68] sm:$0xff]
    %v241 = vld [vmem:[#allocation9 + $0x70] sm:$0xff]
    %v242 = vld [vmem:[#allocation9 + $0x78] sm:$0xff]
    %v243 = vld [vmem:[#allocation9 + $0x80] sm:$0xff]
    %v244 = vld [vmem:[#allocation9 + $0x88] sm:$0xff]
    %v245 = vld [vmem:[#allocation9 + $0x90] sm:$0xff]
    %v246 = vld [vmem:[#allocation9 + $0x98] sm:$0xff]
    %v247 = vld [vmem:[#allocation9 + $0xa0] sm:$0xff]
    %v248 = vld [vmem:[#allocation9 + $0xa8] sm:$0xff]
    %v249 = vld [vmem:[#allocation9 + $0xb0] sm:$0xff]
    %v250 = vld [vmem:[#allocation9 + $0xb8] sm:$0xff]
    %v251 = vld [vmem:[#allocation9 + $0xc0] sm:$0xff]
    %v252 = vld [vmem:[#allocation9 + $0xc8] sm:$0xff]
    %v253 = vld [vmem:[#allocation9 + $0xd0] sm:$0xff]
    %v254 = vld [vmem:[#allocation9 + $0xd8] sm:$0xff]
    %v255 = vld [vmem:[#allocation9 + $0xe0] sm:$0xff]
    %v256 = vld [vmem:[#allocation9 + $0xe8] sm:$0xff]
    %v257 = vld [vmem:[#allocation9 + $0xf0] sm:$0xff]
    %v258 = vld [vmem:[#allocation9 + $0xf8] sm:$0xff]
    %v259 = vld [vmem:[%s7] sm:$0x1]
    %v261 = vperm.slane %v259, 0
    %263 = vmatpush.msra.mxu0 %v242
    %264 = vmatpush.msra.mxu0 %v241
    %265 = vmatpush.msra.mxu0 %v240
    %266 = vmatpush.msra.mxu0 %v239
    %267 = vmatpush.msra.mxu0 %v238
    %268 = vmatpush.msra.mxu0 %v237
    %269 = vmatpush.msra.mxu0 %v236
    %270 = vmatpush.msra.mxu0 %v235
    %271 = vmatpush.msra.mxu0 %v234
    %272 = vmatpush.msra.mxu0 %v233
    %273 = vmatpush.msra.mxu0 %v232
    %274 = vmatpush.msra.mxu0 %v231
    %275 = vmatpush.msra.mxu0 %v230
    %276 = vmatpush.msra.mxu0 %v229
    %277 = vmatpush.msra.mxu0 %v228
    %278 = vmatpush.msra.mxu0 %v227
    %279 = vmatmul.f32.gmra.mxu0 %v202
    %v280 = vpop.f32.mrf.mxu0
    %v281 = vadd.f32 %v261, %v280
    %282 = vmatmul.f32.gmra.mxu0 %v203
    %v283 = vpop.f32.mrf.mxu0
    %v284 = vadd.f32 %v261, %v283
    %285 = vdwg.mxu0
    %286 = vmatpush.msra.mxu0 %v258
    %287 = vmatpush.msra.mxu0 %v257
    %288 = vmatpush.msra.mxu0 %v256
    %289 = vmatpush.msra.mxu0 %v255
    %290 = vmatpush.msra.mxu0 %v254
    %291 = vmatpush.msra.mxu0 %v253
    %292 = vmatpush.msra.mxu0 %v252
    %293 = vmatpush.msra.mxu0 %v251
    %294 = vmatpush.msra.mxu0 %v250
    %295 = vmatpush.msra.mxu0 %v249
    %296 = vmatpush.msra.mxu0 %v248
    %297 = vmatpush.msra.mxu0 %v247
    %298 = vmatpush.msra.mxu0 %v246
    %299 = vmatpush.msra.mxu0 %v245
    %300 = vmatpush.msra.mxu0 %v244
    %301 = vmatpush.msra.mxu0 %v243
    %302 = vmatmul.f32.gmra.mxu0 %v222
    %v303 = vpop.f32.mrf.mxu0
    %v304 = vadd.f32 %v281, %v303
    %305 = vmatmul.f32.gmra.mxu0 %v225
    %v306 = vpop.f32.mrf.mxu0
    %v307 = vadd.f32 %v284, %v306
    %308 = vdwg.mxu0
    %309 = vst [vmem:[#allocation2] sm:$0xff] %v304
    %310 = vst [vmem:[#allocation2 + $0x8] sm:$0xff] %v307
    %v311 = vlaneseq
    %v312 = vand.u32 %v311, 127
    %s313 = sld [smem:[#allocation3]]
    %s314 = scalar_lea.vmem [#allocation2], %s313
    %v315 = vld [vmem:[%s314] sm:$0x1]
    %s316 = sld [smem:[#allocation6]]
    %s317 = scalar_lea.vmem [#allocation2], %s316
    %v318 = vld [vmem:[%s317] sm:$0x1]
    %v319 = vmul.f32 %v315, %v318
    %vm320 = vcmask 1040384
    %v321 = vsel %vm320, %v319, 0.0
    %322 = vadd.xlane.f32.xlu0 %v321
    %v323 = vpop.xlane.xlu0 %322
    %v324 = vrot.slane %v323, 4
    %v325 = vadd.f32 %v323, %v324
    %v326 = vrot.slane %v325, 2
    %v327 = vadd.f32 %v325, %v326
    %v328 = vrot.slane %v327, 1
    %v329 = vadd.f32 %v327, %v328
    %s330 = vtos %v329
    %vm331 = vcmp.eq.s32.totalorder %v312, 0
    %v332 = vstv %s330
    %v333 = vsel %vm331, %v332, 0.0
    %v334 = vadd.f32 %v333, 0.0
    %s335 = sld [smem:[#allocation3 + $0x1]]
    %s336 = scalar_lea.vmem [#allocation2], %s335
    %v337 = vld [vmem:[%s336] sm:$0x1]
    %s338 = sld [smem:[#allocation6 + $0x1]]
    %s339 = scalar_lea.vmem [#allocation2], %s338
    %v340 = vld [vmem:[%s339] sm:$0x1]
    %v341 = vmul.f32 %v337, %v340
    %v342 = vsel %vm320, %v341, 0.0
    %343 = vadd.xlane.f32.xlu0 %v342
    %v344 = vpop.xlane.xlu0 %343
    %v345 = vrot.slane %v344, 4
    %v346 = vadd.f32 %v344, %v345
    %v347 = vrot.slane %v346, 2
    %v348 = vadd.f32 %v346, %v347
    %v349 = vrot.slane %v348, 1
    %v350 = vadd.f32 %v348, %v349
    %s351 = vtos %v350
    %vm352 = vcmp.eq.s32.totalorder %v312, 1
    %v353 = vstv %s351
    %v354 = vsel %vm352, %v353, 0.0
    %v355 = vadd.f32 %v334, %v354
    %s356 = sld [smem:[#allocation3 + $0x2]]
    %s357 = scalar_lea.vmem [#allocation2], %s356
    %v358 = vld [vmem:[%s357] sm:$0x1]
    %s359 = sld [smem:[#allocation6 + $0x2]]
    %s360 = scalar_lea.vmem [#allocation2], %s359
    %v361 = vld [vmem:[%s360] sm:$0x1]
    %v362 = vmul.f32 %v358, %v361
    %v363 = vsel %vm320, %v362, 0.0
    %364 = vadd.xlane.f32.xlu0 %v363
    %v365 = vpop.xlane.xlu0 %364
    %v366 = vrot.slane %v365, 4
    %v367 = vadd.f32 %v365, %v366
    %v368 = vrot.slane %v367, 2
    %v369 = vadd.f32 %v367, %v368
    %v370 = vrot.slane %v369, 1
    %v371 = vadd.f32 %v369, %v370
    %s372 = vtos %v371
    %vm373 = vcmp.eq.s32.totalorder %v312, 2
    %v374 = vstv %s372
    %v375 = vsel %vm373, %v374, 0.0
    %v376 = vadd.f32 %v355, %v375
    %s377 = sld [smem:[#allocation3 + $0x3]]
    %s378 = scalar_lea.vmem [#allocation2], %s377
    %v379 = vld [vmem:[%s378] sm:$0x1]
    %s380 = sld [smem:[#allocation6 + $0x3]]
    %s381 = scalar_lea.vmem [#allocation2], %s380
    %v382 = vld [vmem:[%s381] sm:$0x1]
    %v383 = vmul.f32 %v379, %v382
    %v384 = vsel %vm320, %v383, 0.0
    %385 = vadd.xlane.f32.xlu0 %v384
    %v386 = vpop.xlane.xlu0 %385
    %v387 = vrot.slane %v386, 4
    %v388 = vadd.f32 %v386, %v387
    %v389 = vrot.slane %v388, 2
    %v390 = vadd.f32 %v388, %v389
    %v391 = vrot.slane %v390, 1
    %v392 = vadd.f32 %v390, %v391
    %s393 = vtos %v392
    %vm394 = vcmp.eq.s32.totalorder %v312, 3
    %v395 = vstv %s393
    %v396 = vsel %vm394, %v395, 0.0
    %v397 = vadd.f32 %v376, %v396
    %s398 = sld [smem:[#allocation3 + $0x4]]
    %s399 = scalar_lea.vmem [#allocation2], %s398
    %v400 = vld [vmem:[%s399] sm:$0x1]
    %s401 = sld [smem:[#allocation6 + $0x4]]
    %s402 = scalar_lea.vmem [#allocation2], %s401
    %v403 = vld [vmem:[%s402] sm:$0x1]
    %v404 = vmul.f32 %v400, %v403
    %v405 = vsel %vm320, %v404, 0.0
    %406 = vadd.xlane.f32.xlu0 %v405
    %v407 = vpop.xlane.xlu0 %406
    %v408 = vrot.slane %v407, 4
    %v409 = vadd.f32 %v407, %v408
    %v410 = vrot.slane %v409, 2
    %v411 = vadd.f32 %v409, %v410
    %v412 = vrot.slane %v411, 1
    %v413 = vadd.f32 %v411, %v412
    %s414 = vtos %v413
    %vm415 = vcmp.eq.s32.totalorder %v312, 4
    %v416 = vstv %s414
    %v417 = vsel %vm415, %v416, 0.0
    %v418 = vadd.f32 %v397, %v417
    %s419 = sld [smem:[#allocation3 + $0x5]]
    %s420 = scalar_lea.vmem [#allocation2], %s419
    %v421 = vld [vmem:[%s420] sm:$0x1]
    %s422 = sld [smem:[#allocation6 + $0x5]]
    %s423 = scalar_lea.vmem [#allocation2], %s422
    %v424 = vld [vmem:[%s423] sm:$0x1]
    %v425 = vmul.f32 %v421, %v424
    %v426 = vsel %vm320, %v425, 0.0
    %427 = vadd.xlane.f32.xlu0 %v426
    %v428 = vpop.xlane.xlu0 %427
    %v429 = vrot.slane %v428, 4
    %v430 = vadd.f32 %v428, %v429
    %v431 = vrot.slane %v430, 2
    %v432 = vadd.f32 %v430, %v431
    %v433 = vrot.slane %v432, 1
    %v434 = vadd.f32 %v432, %v433
    %s435 = vtos %v434
    %vm436 = vcmp.eq.s32.totalorder %v312, 5
    %v437 = vstv %s435
    %v438 = vsel %vm436, %v437, 0.0
    %v439 = vadd.f32 %v418, %v438
    %s440 = sld [smem:[#allocation3 + $0x6]]
    %s441 = scalar_lea.vmem [#allocation2], %s440
    %v442 = vld [vmem:[%s441] sm:$0x1]
    %s443 = sld [smem:[#allocation6 + $0x6]]
    %s444 = scalar_lea.vmem [#allocation2], %s443
    %v445 = vld [vmem:[%s444] sm:$0x1]
    %v446 = vmul.f32 %v442, %v445
    %v447 = vsel %vm320, %v446, 0.0
    %448 = vadd.xlane.f32.xlu0 %v447
    %v449 = vpop.xlane.xlu0 %448
    %v450 = vrot.slane %v449, 4
    %v451 = vadd.f32 %v449, %v450
    %v452 = vrot.slane %v451, 2
    %v453 = vadd.f32 %v451, %v452
    %v454 = vrot.slane %v453, 1
    %v455 = vadd.f32 %v453, %v454
    %s456 = vtos %v455
    %vm457 = vcmp.eq.s32.totalorder %v312, 6
    %v458 = vstv %s456
    %v459 = vsel %vm457, %v458, 0.0
    %v460 = vadd.f32 %v439, %v459
    %s461 = sld [smem:[#allocation3 + $0x7]]
    %s462 = scalar_lea.vmem [#allocation2], %s461
    %v463 = vld [vmem:[%s462] sm:$0x1]
    %s464 = sld [smem:[#allocation6 + $0x7]]
    %s465 = scalar_lea.vmem [#allocation2], %s464
    %v466 = vld [vmem:[%s465] sm:$0x1]
    %v467 = vmul.f32 %v463, %v466
    %v468 = vsel %vm320, %v467, 0.0
    %469 = vadd.xlane.f32.xlu0 %v468
    %v470 = vpop.xlane.xlu0 %469
    %v471 = vrot.slane %v470, 4
    %v472 = vadd.f32 %v470, %v471
    %v473 = vrot.slane %v472, 2
    %v474 = vadd.f32 %v472, %v473
    %v475 = vrot.slane %v474, 1
    %v476 = vadd.f32 %v474, %v475
    %s477 = vtos %v476
    %vm478 = vcmp.eq.s32.totalorder %v312, 7
    %v479 = vstv %s477
    %v480 = vsel %vm478, %v479, 0.0
    %v481 = vadd.f32 %v460, %v480
    %482 = vst [vmem:[%s8] sm:$0x1] %v481
    // Predicated region
    $region50: #{model_forward.1} parent=1 // pred_check
      _
    $region51: #{model_forward.1} parent=1 // pred_check_branch
      %484 = sbr.rel (0) target = $region53
    $region52: #{model_forward.1} parent=1 // pred_region
      _
    $region53: #{model_forward.1} parent=1 // pred_fallthru
      _
    // Predicated region
    $region54: #{model_forward.1} parent=1 // pred_check
      _
    $region55: #{model_forward.1} parent=1 // pred_check_branch
      %486 = sbr.rel (0) target = $region57
    $region56: #{model_forward.1} parent=1 // pred_region
      _
    $region57: #{model_forward.1} parent=1 // pred_fallthru
      _
    %487 = vsyncpa [#allocation4], 1
    %488 = vsyncpa [#allocation10], 1
    %489 = vsyncpa [#allocation5], 1
    %490 = vsyncpa [#allocation7], 1

</llo_original>
